<compile_context>
chip_gen: v7x
topology: tpu7x:2x2x1
jax: 0.10.0
libtpu: 0.0.40
codegen_flags: <defaults>
</compile_context>

<pallas_src>
import jax
import jax.numpy as jnp
from jax.experimental import pallas as pl
from jax.experimental.pallas import tpu as pltpu

_LANE = 128
_MAX_BLOCK_ROWS = 4096                 # 4096*128*4B = 2 MiB per f32 buffer
_VMEM_LIMIT_BYTES = 32 * 1024 * 1024   # explicit scoped-VMEM budget


# ----------------------- forward: HBM->HBM clone -----------------------------
def _clone_kernel(x_hbm, o_hbm, sem):
    cp = pltpu.make_async_copy(x_hbm, o_hbm, sem)
    cp.start()
    cp.wait()


def _pallas_clone(x):
    if x.size == 0:               # nothing to copy; avoid a zero-byte DMA
        return x
    return pl.pallas_call(
        _clone_kernel,
        out_shape=jax.ShapeDtypeStruct(x.shape, x.dtype),
        in_specs=[pl.BlockSpec(memory_space=pl.ANY)],
        out_specs=pl.BlockSpec(memory_space=pl.ANY),
        scratch_shapes=[pltpu.SemaphoreType.DMA],
    )(x)


# ----------------------- backward: dx = lambda_ * g ---------------------------
def _scale_kernel(g_ref, lam_ref, o_ref):
    # lam_ref is a (1,) f32 scalar in SMEM; cast once so the multiply stays in
    # g's dtype (bf16 vregs on v6e/v7x; no-op for f32).
    o_ref[...] = g_ref[...] * lam_ref[0].astype(g_ref.dtype)


def _pallas_scale(g, lam):
    """lam * g as a lane-dense tiled kernel; handles any shape via padding."""
    if g.size == 0:
        return g
    total = g.size
    flat = g.reshape(total)
    pad = (-total) % _LANE
    if pad:
        flat = jnp.pad(flat, (0, pad))       # pad to 128-multiple: unmasked vst
    rows = flat.size // _LANE
    g2 = flat.reshape(rows, _LANE)
    tm = rows if rows <= _MAX_BLOCK_ROWS else _MAX_BLOCK_ROWS

    out2 = pl.pallas_call(
        _scale_kernel,
        out_shape=jax.ShapeDtypeStruct((rows, _LANE), g.dtype),
        grid=(pl.cdiv(rows, tm),),
        in_specs=[
            pl.BlockSpec((tm, _LANE), lambda i: (i, 0)),
            pl.BlockSpec(memory_space=pltpu.MemorySpace.SMEM),  # lambda scalar
        ],
        out_specs=pl.BlockSpec((tm, _LANE), lambda i: (i, 0)),
        input_output_aliases={0: 0},          # donate the incoming-grad buffer
        compiler_params=pltpu.CompilerParams(
            dimension_semantics=("parallel",),
            vmem_limit_bytes=_VMEM_LIMIT_BYTES,
        ),
    )(g2, lam)

    out = out2.reshape(flat.size)
    if pad:
        out = out[:total]
    return out.reshape(g.shape)


# ----------------------------- public op -------------------------------------
@jax.custom_vjp
def gradient_reversal(x, lambda_):
    """Forward: materialized copy of x (matches GradientReversalFunction.forward)."""
    del lambda_
    return _pallas_clone(x)


def _grl_fwd(x, lambda_):
    lam = jnp.asarray(lambda_, jnp.float32).reshape(1)
    return _pallas_clone(x), (lam, lambda_)


def _grl_bwd(res, g):
    lam, lambda_primal = res
    dx = _pallas_scale(g, lam)
    # lambda_ gets no gradient in the PyTorch module; return zeros matching
    # the primal's aval so custom_vjp accepts the cotangent.
    lam_ct = jax.tree_util.tree_map(jnp.zeros_like, lambda_primal)
    return dx, lam_ct


gradient_reversal.defvjp(_grl_fwd, _grl_bwd)


# ------------------------------- demo -----------------------------------------
if __name__ == "__main__":
    key = jax.random.PRNGKey(0)
    key_a, key_b = jax.random.split(key)
    lambda_ = jnp.float32(0.75)

    # Lane-dense case: 2*4*16*16 = 2048 elements (multiple of 128).
    x = jax.random.normal(key_a, (2, 4, 16, 16), jnp.float32)
    y = jax.jit(gradient_reversal)(x, lambda_)
    jax.block_until_ready(y)
    assert y.shape == x.shape and y.dtype == x.dtype
    assert bool(jnp.array_equal(y, x))

    g = jax.jit(jax.grad(lambda a, l: jnp.sum(gradient_reversal(a, l))))(x, lambda_)
    jax.block_until_ready(g)
    assert bool(jnp.allclose(g, jnp.full_like(x, 0.75)))

    # Odd-size case exercising the padded backward path: 3*5*7 = 105 elements.
    x2 = jax.random.normal(key_b, (3, 5, 7), jnp.float32)
    y2 = jax.jit(gradient_reversal)(x2, lambda_)
    g2 = jax.jit(jax.grad(lambda a, l: jnp.sum(gradient_reversal(a, l))))(x2, lambda_)
    jax.block_until_ready((y2, g2))
    assert bool(jnp.array_equal(y2, x2))
    assert bool(jnp.allclose(g2, jnp.full_like(x2, 0.75)))

    print("KERNEL_OK")
</pallas_src>

<mosaic_0001>
module attributes {stable_mosaic.version = 11 : i64} {
  func.func @_clone_kernel(%arg0: memref<2x4x16x16xf32, #tpu.memory_space<any>>, %arg1: memref<2x4x16x16xf32, #tpu.memory_space<any>>, %arg2: memref<!tpu.dma_semaphore, #tpu.memory_space<semaphore_mem>>) attributes {dimension_semantics = [], scalar_prefetch = 0 : i64, scratch_operands = 1 : i64, tpu.core_type = #tpu.core_type<tc>} {
    tpu.enqueue_dma source(%arg0 : memref<2x4x16x16xf32, #tpu.memory_space<any>>) target(%arg1 : memref<2x4x16x16xf32, #tpu.memory_space<any>>) target_semaphore(%arg2 : memref<!tpu.dma_semaphore, #tpu.memory_space<semaphore_mem>>)
    tpu.wait_dma2 semaphore(%arg2 : memref<!tpu.dma_semaphore, #tpu.memory_space<semaphore_mem>>) src(%arg0 : memref<2x4x16x16xf32, #tpu.memory_space<any>>) dst(%arg1 : memref<2x4x16x16xf32, #tpu.memory_space<any>>)
    return
  }
}

</mosaic_0001>

<llo_original>
// kernel: gradient_reversal.1
$region0: #{gradient_reversal.1}
  #allocation0 [shape = 'u32[]', space=smem, size = 0x4, offset = 0x4, fixed_abs, tag = 'smem constant byte address 0x4 - core index']
  #allocation1 [shape = 'u32[144,128]{1,0:T(1,128)}', space=vmem, size = 0x12000, scoped, tag = 'internal scratch']
  #allocation2 [shape = 's32[1]{0}', space=sflag, size = 0x4, scoped, tag = 'scratch operand']
  #allocation3 [shape = 's32[]', space=sflag, size = 0x4, offset = 0, fixed_abs, tag = 'sflag constant byte address 0x0 - dummy sync flag']
  #allocation4 [shape = 'u32[0]{0}', space=smem, size = 0, offset = 0, fixed_abs, tag = 'smem constant byte address 0x0 - null']
  %s0 = inlined_call_operand.hbm [shape: f32[2,4,16,16], index: 0, kind: input, shape index: {}]
  %s1 = inlined_call_operand.hbm [shape: f32[2,4,16,16], index: 1, kind: output, shape index: {}]
  %s2 = sld [smem:[#allocation0]]
  $region2: #{gradient_reversal.1} parent=0
    _
  %s4 = ssub.s32 1, %s2
  %s5 = scalar_select 0, %s4, %s2
  %s7 = sshll.u32 1, 14
  %s8 = sxor.u32 4294967295, %s7
  %s11 = sshll.u32 3, 24
  %s12 = sxor.u32 4294967295, %s11
  %s13 = sand.u32 0, %s12
  %s15 = sor.u32 %s13, 0
  %18 = dma.general %s0, 2048, %s1, [#allocation2], [#allocation3], [#allocation4], %s15, 0
  %s19 = smul.u32 2, 4
  %s20 = smul.u32 %s19, 16
  %s21 = smul.u32 %s20, 1
  %s22 = sshll.u32 %s21, 4
  %23 = dma.done [#allocation2], %s22
  %24 = vsyncmov [#allocation2]
  %s25 = vpop.sfrf %24
  %p26 = scmp.eq.s32.totalorder %s25, 0
  %p27 = pneg %p26
  %29 = shalt.err (%p27)

</llo_original>
